<compile_context>
chip_gen: v5e
topology: v5e:2x2
jax: 0.10.0
libtpu: 0.0.40
codegen_flags: <defaults>
</compile_context>

<pallas_src>
import functools

import jax
import jax.numpy as jnp
from jax.experimental import pallas as pl
from jax.experimental.pallas import tpu as pltpu

INV_SQRT2 = 0.7071067811865476
HP = 128  # lane-padded head axis (review: avoid the [N, 4] lane-sparse region)


def _erf(x):
    # Abramowitz & Stegun 7.1.26; divide replaced with EUP approx reciprocal.
    a1, a2, a3, a4, a5 = 0.254829592, -0.284496736, 1.421413741, -1.453152027, 1.061405429
    p = 0.3275911
    s = jnp.sign(x)
    ax = jnp.abs(x)
    t = pl.reciprocal(1.0 + p * ax, approx=True)
    poly = ((((a5 * t + a4) * t + a3) * t + a2) * t + a1) * t
    return s * (1.0 - poly * jnp.exp(-ax * ax))


def _gelu(x):
    # matches torch.nn.GELU() (erf formulation) up to the approximations above
    return 0.5 * x * (1.0 + _erf(x * INV_SQRT2))


# ----------------------------------------------------------------------------
# Kernel A: graph aggregation + conv1x1 + Q/K/V projections  (row-tiled grid)
# ----------------------------------------------------------------------------
def _agg_conv_qkv_kernel(adj_ref, x_ref, sn_ref, wc_ref, rk1_ref, cb_ref,
                         wqkv_ref, bq_ref, bk_ref, bv_ref,
                         q_ref, k_ref, v_ref, *, dim, tile_n):
    f32, bf16 = jnp.float32, jnp.bfloat16
    d, t = dim, tile_n

    # One fused MXU matmul for all three aggregations (shared RHS x):
    #   adj slab is [3T, N] bf16, rows pre-scaled by 1/in_degree in the wrapper.
    r = jnp.dot(adj_ref[...], x_ref[...], preferred_element_type=f32)   # [3T, D]
    m_a = r[0:t].astype(bf16)          # mean_e(x_src)           (shared by x_0/x_1)
    m_w = r[t:2 * t].astype(bf16)      # x_2 = mean_e(x_src * norm)
    m_i = r[2 * t:3 * t].astype(bf16)  # x_3 = mean_e(x_src / norm)

    i0 = pl.multiple_of(pl.program_id(0) * t, t)
    x_row = x_ref[pl.ds(i0, t), :]                                       # [T, D] bf16

    wc = wc_ref[...]                                                     # [4D, D] bf16
    # conv1x1 on cat((x_1, x_2, x_0, x_, x_3)) with x_0/x_1 folded:
    #   x_1@W0 + x_0@W2 = m_a@(W0+W2) + (snorm/in_deg) (x) colsum(W2 - W0)
    xc = (jnp.dot(m_a, wc[0:d], preferred_element_type=f32)
          + jnp.dot(m_w, wc[d:2 * d], preferred_element_type=f32)
          + jnp.dot(m_i, wc[2 * d:3 * d], preferred_element_type=f32)
          + jnp.dot(x_row, wc[3 * d:4 * d], preferred_element_type=f32)
          + sn_ref[...] * rk1_ref[...]        # rank-1 term (VPU broadcast-multiply)
          + cb_ref[...])

    xc_b = xc.astype(bf16)
    wqkv = wqkv_ref[...]                                                 # [3D, D] bf16
    q_ref[...] = jnp.dot(xc_b, wqkv[0:d], preferred_element_type=f32) + bq_ref[...]
    k_ref[...] = jnp.dot(xc_b, wqkv[d:2 * d], preferred_element_type=f32) + bk_ref[...]
    v_ref[...] = jnp.dot(xc_b, wqkv[2 * d:3 * d], preferred_element_type=f32) + bv_ref[...]


# ----------------------------------------------------------------------------
# Kernel B: global normalizations + head softmax + sim attention + feed-forward
# ----------------------------------------------------------------------------
def _attention_ff_kernel(q_ref, k_ref, v_ref, noise_ref, hm_ref,
                         w1_ref, b1_ref, w2_ref, b2_ref,
                         out_ref, sim_ref, vn_ref, acc_ref,
                         *, num_heads, tile_n, n):
    f32, bf16 = jnp.float32, jnp.bfloat16
    q = q_ref[...]
    k = k_ref[...]
    v = v_ref[...]
    d = q.shape[1]
    hp = hm_ref.shape[1]

    # Fused sum / sum-of-squares global statistics (unbiased std, one pass each).
    cnt = float(n * d)

    def stats(t):
        s = jnp.sum(t)
        ss = jnp.sum(t * t)
        m = s / cnt
        var = (ss - cnt * m * m) / (cnt - 1.0)
        return m, 1.0 / jnp.sqrt(jnp.maximum(var, 1e-30))

    q_mean, q_rstd = stats(q)
    k_mean, k_rstd = stats(k)
    _, v_rstd = stats(v)             # std is shift-invariant: std(v - mean(q)) == std(v)

    q_n = (q - q_mean) * q_rstd
    k_n = (k - k_mean) * k_rstd
    vn_ref[...] = (v - q_mean) * v_rstd   # module quirk: values centered by mean(queries)

    # per-node per-head score via lane-dense head-mask matmul -> [N, HP]
    score = jnp.dot(q_n * k_n, hm_ref[...], preferred_element_type=f32)
    mask = jax.lax.broadcasted_iota(jnp.int32, (n, hp), 1) < num_heads
    neg = jnp.finfo(f32).min
    smax = jnp.max(jnp.where(mask, score, neg), axis=-1, keepdims=True)
    p = jnp.where(mask, jnp.exp(score - smax), 0.0)
    p = p * pl.reciprocal(jnp.sum(p, axis=-1, keepdims=True), approx=True)

    cnt_h = float(n * num_heads)
    mu = jnp.sum(p) / cnt_h
    var_s = (jnp.sum(p * p) - cnt_h * mu * mu) / (cnt_h - 1.0)
    sim_rstd = 1.0 / jnp.sqrt(jnp.maximum(var_s, 1e-30))
    # padded lanes are forced to 0 so the sim@sim.T contraction ignores them
    sim_ref[...] = jnp.where(mask, (p - mu) * sim_rstd + noise_ref[...], 0.0)

    acc_ref[...] = jnp.zeros_like(acc_ref)

    # Stream [TILE, N] slabs of sim_squared: exact row softmax per slab, then
    # accumulate sim_sq^T @ values.  The full [N, N] matrix is never materialized.
    nblk = n // tile_n

    def sblock(blk, carry):
        i0 = pl.multiple_of(blk * tile_n, tile_n)
        sim_blk = sim_ref[pl.ds(i0, tile_n), :]                          # [T, HP]
        v_blk = vn_ref[pl.ds(i0, tile_n), :]                             # [T, D]
        s = jax.lax.dot_general(sim_blk, sim_ref[...],
                                (((1,), (1,)), ((), ())),
                                preferred_element_type=f32)              # [T, N]
        s = s - jnp.max(s, axis=1, keepdims=True)
        e = jnp.exp(s)
        e = e * pl.reciprocal(jnp.sum(e, axis=1, keepdims=True), approx=True)
        acc_ref[...] += jax.lax.dot_general(e, v_blk,
                                            (((0,), (0,)), ((), ())),
                                            preferred_element_type=f32)  # [N, D]
        return carry

    jax.lax.fori_loop(0, nblk, sblock, 0)

    # feed-forward: Linear(D, D*H) -> GELU -> Linear(D*H, D)   (dropout = identity)
    h = jnp.dot(acc_ref[...].astype(bf16), w1_ref[...],
                preferred_element_type=f32) + b1_ref[...]
    h = _gelu(h)
    out_ref[...] = jnp.dot(h.astype(bf16), w2_ref[...],
                           preferred_element_type=f32) + b2_ref[...]


# ----------------------------------------------------------------------------
# Wrapper / glue
# ----------------------------------------------------------------------------
def transformer_attention_sep_forward(x_, graph_mats, params, noise, *,
                                      dim, num_heads, tile_n=16):
    n = x_.shape[0]
    at_s, wt_s, winvt_s, sn = graph_mats
    assert dim % num_heads == 0
    assert n % tile_n == 0 and tile_n % 16 == 0      # bf16 sublane-tile alignment
    assert num_heads <= HP
    nb = n // tile_n
    head_dim = dim // num_heads
    d = dim
    f32, bf16 = jnp.float32, jnp.bfloat16

    # --- operand packing / narrowing (done once, outside the kernels) ---
    # Block-interleave the three (1/in_deg-scaled, transposed) adjacency matrices
    # so grid step i DMAs one contiguous [3*tile_n, n] bf16 slab.
    g = jnp.stack([at_s, wt_s, winvt_s], axis=0)                         # [3, n, n]
    g = (g.reshape(3, nb, tile_n, n).transpose(1, 0, 2, 3)
           .reshape(3 * n, n).astype(bf16))

    W = params["conv_w"]                   # [5D, D], cat order (x_1, x_2, x_0, x_, x_3)
    W0, W1, W2, W3, W4 = W[0:d], W[d:2 * d], W[2 * d:3 * d], W[3 * d:4 * d], W[4 * d:5 * d]
    wc = jnp.concatenate([W0 + W2, W1, W4, W3], axis=0).astype(bf16)     # [4D, D]
    rank1 = (jnp.sum(W2, axis=0, keepdims=True)
             - jnp.sum(W0, axis=0, keepdims=True)).astype(f32)           # [1, D]
    wqkv = jnp.concatenate([params["wq"], params["wk"], params["wv"]],
                           axis=0).astype(bf16)                          # [3D, D]

    x_b = x_.astype(bf16)
    hm = (jnp.arange(dim)[:, None] // head_dim
          == jnp.arange(HP)[None, :]).astype(f32)                        # [D, HP]
    noise_pad = jnp.zeros((n, HP), f32).at[:, :num_heads].set(noise)
    # TODO(synk): the reference samples torch.randn per call; here the gaussian
    # noise is a deterministic input (could be generated in-kernel via pltpu.prng_*).

    # ---------------- Kernel A: row-tiled, megacore-parallel grid ----------------
    kA = functools.partial(_agg_conv_qkv_kernel, dim=dim, tile_n=tile_n)
    q, k, v = pl.pallas_call(
        kA,
        grid=(nb,),
        out_shape=(jax.ShapeDtypeStruct((n, dim), f32),) * 3,
        in_specs=[
            pl.BlockSpec((3 * tile_n, n), lambda i: (i, 0)),   # adjacency slab (bf16)
            pl.BlockSpec((n, dim), lambda i: (0, 0)),          # x_ (bf16, resident RHS)
            pl.BlockSpec((tile_n, 1), lambda i: (i, 0)),       # snorm / in_deg
            pl.BlockSpec((4 * dim, dim), lambda i: (0, 0)),    # folded conv weights
            pl.BlockSpec((1, dim), lambda i: (0, 0)),          # rank-1 fold term
            pl.BlockSpec((1, dim), lambda i: (0, 0)),          # conv bias
            pl.BlockSpec((3 * dim, dim), lambda i: (0, 0)),    # stacked wq/wk/wv
            pl.BlockSpec((1, dim), lambda i: (0, 0)),          # bq
            pl.BlockSpec((1, dim), lambda i: (0, 0)),          # bk
            pl.BlockSpec((1, dim), lambda i: (0, 0)),          # bv
        ],
        out_specs=(pl.BlockSpec((tile_n, dim), lambda i: (i, 0)),) * 3,
        compiler_params=pltpu.CompilerParams(
            dimension_semantics=("parallel",),
            vmem_limit_bytes=64 * 1024 * 1024),
    )(g, x_b, sn, wc, rank1, params["conv_b"], wqkv,
      params["bq"], params["bk"], params["bv"])

    # ---------------- Kernel B: global norms + sim attention + FF ----------------
    kB = functools.partial(_attention_ff_kernel, num_heads=num_heads,
                           tile_n=tile_n, n=n)
    out = pl.pallas_call(
        kB,
        out_shape=jax.ShapeDtypeStruct((n, dim), f32),
        in_specs=[pl.BlockSpec(memory_space=pltpu.MemorySpace.VMEM)] * 9,
        out_specs=pl.BlockSpec(memory_space=pltpu.MemorySpace.VMEM),
        scratch_shapes=[pltpu.VMEM((n, HP), f32),    # sim (lane-padded)
                        pltpu.VMEM((n, dim), f32),   # normalized values
                        pltpu.VMEM((n, dim), f32)],  # aggregation accumulator
        compiler_params=pltpu.CompilerParams(vmem_limit_bytes=64 * 1024 * 1024),
    )(q, k, v, noise_pad, hm,
      params["ff_w1"].astype(bf16), params["ff_b1"],
      params["ff_w2"].astype(bf16), params["ff_b2"])
    return out


def build_graph_mats(src, dst, n):
    """Dense encodings of the DGL ops, pre-scaled for the kernels."""
    a = jnp.zeros((n, n), jnp.float32).at[src, dst].set(1.0)
    out_deg = jnp.sum(a, axis=1)                          # graph.out_degrees().float()
    prod = jnp.maximum(out_deg[:, None] * out_deg[None, :], 1e-12)
    norm = a / jnp.sqrt(prod)                             # 1/sqrt(deg_u*deg_v) on edges
    w_inv = a * jnp.sqrt(prod)                            # 1/norm on edges
    in_deg = jnp.sum(a, axis=0)
    invdeg = (1.0 / jnp.maximum(in_deg, 1.0))[:, None]    # mean over incoming edges
    snorm = jnp.sum(norm, axis=0)[:, None]                # sum of norm coefs into dst
    # fold the 1/in_degree of the "mean" reducer into the (transposed) matrices
    return invdeg * a.T, invdeg * norm.T, invdeg * w_inv.T, snorm * invdeg


def init_params(key, dim, num_heads):
    hidden = dim * num_heads
    ks = jax.random.split(key, 6)

    def lin(k, fi, fo):
        kw, kb = jax.random.split(k)
        lim = 1.0 / (fi ** 0.5)
        w = jax.random.uniform(kw, (fi, fo), jnp.float32, -lim, lim)   # stored [in, out]
        b = jax.random.uniform(kb, (1, fo), jnp.float32, -lim, lim)
        return w, b

    conv_w, conv_b = lin(ks[0], 5 * dim, dim)
    wq, bq = lin(ks[1], dim, dim)
    wk, bk = lin(ks[2], dim, dim)
    wv, bv = lin(ks[3], dim, dim)
    ff_w1, ff_b1 = lin(ks[4], dim, hidden)
    ff_w2, ff_b2 = lin(ks[5], hidden, dim)
    return dict(conv_w=conv_w, conv_b=conv_b, wq=wq, bq=bq, wk=wk, bk=bk,
                wv=wv, bv=bv, ff_w1=ff_w1, ff_b1=ff_b1, ff_w2=ff_w2, ff_b2=ff_b2)


if __name__ == "__main__":
    N, DIM, HEADS, TILE_N = 32, 32, 4, 16
    key = jax.random.PRNGKey(0)
    k_x, k_p, k_n = jax.random.split(key, 3)

    # synthetic graph: self-loops + two ring offsets (every node has in/out degree 3)
    nodes = jnp.arange(N)
    src = jnp.concatenate([nodes, nodes, nodes])
    dst = jnp.concatenate([nodes, (nodes + 1) % N, (nodes + 3) % N])
    graph_mats = build_graph_mats(src, dst, N)

    x_ = jax.random.normal(k_x, (N, DIM), jnp.float32)
    params = init_params(k_p, DIM, HEADS)
    # torch.randn_like(sim) * 0.004, made deterministic with a fixed key
    noise = jax.random.normal(k_n, (N, HEADS), jnp.float32) * 0.004

    out = transformer_attention_sep_forward(x_, graph_mats, params, noise,
                                            dim=DIM, num_heads=HEADS, tile_n=TILE_N)
    out = jax.block_until_ready(out)
    assert out.shape == (N, DIM)
    assert bool(jnp.all(jnp.isfinite(out)))
    print("KERNEL_OK")
</pallas_src>

<mosaic_0001>
module attributes {stable_mosaic.version = 11 : i64} {
  func.func @_agg_conv_qkv_kernel(%arg0: i32, %arg1: memref<48x32xbf16, #tpu.memory_space<vmem>>, %arg2: memref<32x32xbf16, #tpu.memory_space<vmem>>, %arg3: memref<16x1xf32, #tpu.memory_space<vmem>>, %arg4: memref<128x32xbf16, #tpu.memory_space<vmem>>, %arg5: memref<1x32xf32, #tpu.memory_space<vmem>>, %arg6: memref<1x32xf32, #tpu.memory_space<vmem>>, %arg7: memref<96x32xbf16, #tpu.memory_space<vmem>>, %arg8: memref<1x32xf32, #tpu.memory_space<vmem>>, %arg9: memref<1x32xf32, #tpu.memory_space<vmem>>, %arg10: memref<1x32xf32, #tpu.memory_space<vmem>>, %arg11: memref<16x32xf32, #tpu.memory_space<vmem>>, %arg12: memref<16x32xf32, #tpu.memory_space<vmem>>, %arg13: memref<16x32xf32, #tpu.memory_space<vmem>>) attributes {dimension_semantics = [#tpu.dimension_semantics<parallel>], iteration_bounds = array<i64: 2>, scalar_prefetch = 0 : i64, scratch_operands = 0 : i64, tpu.core_type = #tpu.core_type<tc>, window_params = [{transform_indices = @transform_0, window_bounds = array<i64: 48, 32>}, {pipeline_mode = #tpu.pipeline_mode<synchronous>, transform_indices = @transform_1, window_bounds = array<i64: 32, 32>}, {transform_indices = @transform_2, window_bounds = array<i64: 16, 1>}, {pipeline_mode = #tpu.pipeline_mode<synchronous>, transform_indices = @transform_3, window_bounds = array<i64: 128, 32>}, {pipeline_mode = #tpu.pipeline_mode<synchronous>, transform_indices = @transform_4, window_bounds = array<i64: 1, 32>}, {pipeline_mode = #tpu.pipeline_mode<synchronous>, transform_indices = @transform_5, window_bounds = array<i64: 1, 32>}, {pipeline_mode = #tpu.pipeline_mode<synchronous>, transform_indices = @transform_6, window_bounds = array<i64: 96, 32>}, {pipeline_mode = #tpu.pipeline_mode<synchronous>, transform_indices = @transform_7, window_bounds = array<i64: 1, 32>}, {pipeline_mode = #tpu.pipeline_mode<synchronous>, transform_indices = @transform_8, window_bounds = array<i64: 1, 32>}, {pipeline_mode = #tpu.pipeline_mode<synchronous>, transform_indices = @transform_9, window_bounds = array<i64: 1, 32>}, {transform_indices = @transform_10, window_bounds = array<i64: 16, 32>}, {transform_indices = @transform_11, window_bounds = array<i64: 16, 32>}, {transform_indices = @transform_12, window_bounds = array<i64: 16, 32>}]} {
    %c0 = arith.constant 0 : index
    %c0_0 = arith.constant 0 : index
    %0 = vector.load %arg1[%c0, %c0_0] : memref<48x32xbf16, #tpu.memory_space<vmem>>, vector<48x32xbf16>
    %c0_1 = arith.constant 0 : index
    %c0_2 = arith.constant 0 : index
    %1 = vector.load %arg2[%c0_1, %c0_2] : memref<32x32xbf16, #tpu.memory_space<vmem>>, vector<32x32xbf16>
    %cst = arith.constant dense<0.000000e+00> : vector<48x32xf32>
    %2 = tpu.matmul %0, %1, %cst {dimension_numbers = #tpu.dot_dimension_numbers<[1], [0], [0], [1], [0, 0, 1, 1], [], []>} : vector<48x32xbf16>, vector<32x32xbf16>, vector<48x32xf32> -> vector<48x32xf32>
    %3 = vector.extract_strided_slice %2 {offsets = [0, 0], sizes = [16, 32], strides = [1, 1]} : vector<48x32xf32> to vector<16x32xf32>
    %4 = arith.truncf %3 : vector<16x32xf32> to vector<16x32xbf16>
    %5 = vector.extract_strided_slice %2 {offsets = [16, 0], sizes = [16, 32], strides = [1, 1]} : vector<48x32xf32> to vector<16x32xf32>
    %6 = arith.truncf %5 : vector<16x32xf32> to vector<16x32xbf16>
    %7 = vector.extract_strided_slice %2 {offsets = [32, 0], sizes = [16, 32], strides = [1, 1]} : vector<48x32xf32> to vector<16x32xf32>
    %8 = arith.truncf %7 : vector<16x32xf32> to vector<16x32xbf16>
    %c16_i32 = arith.constant 16 : i32
    %9 = arith.muli %arg0, %c16_i32 : i32
    %10 = tpu.assume_multiple %9, 16 : i32
    %11 = arith.index_cast %10 : i32 to index
    %c0_3 = arith.constant 0 : index
    %12 = vector.load %arg2[%11, %c0_3] : memref<32x32xbf16, #tpu.memory_space<vmem>>, vector<16x32xbf16>
    %c0_4 = arith.constant 0 : index
    %c0_5 = arith.constant 0 : index
    %13 = vector.load %arg4[%c0_4, %c0_5] : memref<128x32xbf16, #tpu.memory_space<vmem>>, vector<128x32xbf16>
    %14 = vector.extract_strided_slice %13 {offsets = [0, 0], sizes = [32, 32], strides = [1, 1]} : vector<128x32xbf16> to vector<32x32xbf16>
    %cst_6 = arith.constant dense<0.000000e+00> : vector<16x32xf32>
    %15 = tpu.matmul %4, %14, %cst_6 {dimension_numbers = #tpu.dot_dimension_numbers<[1], [0], [0], [1], [0, 0, 1, 1], [], []>} : vector<16x32xbf16>, vector<32x32xbf16>, vector<16x32xf32> -> vector<16x32xf32>
    %16 = vector.extract_strided_slice %13 {offsets = [32, 0], sizes = [32, 32], strides = [1, 1]} : vector<128x32xbf16> to vector<32x32xbf16>
    %cst_7 = arith.constant dense<0.000000e+00> : vector<16x32xf32>
    %17 = tpu.matmul %6, %16, %cst_7 {dimension_numbers = #tpu.dot_dimension_numbers<[1], [0], [0], [1], [0, 0, 1, 1], [], []>} : vector<16x32xbf16>, vector<32x32xbf16>, vector<16x32xf32> -> vector<16x32xf32>
    %18 = arith.addf %15, %17 : vector<16x32xf32>
    %19 = vector.extract_strided_slice %13 {offsets = [64, 0], sizes = [32, 32], strides = [1, 1]} : vector<128x32xbf16> to vector<32x32xbf16>
    %cst_8 = arith.constant dense<0.000000e+00> : vector<16x32xf32>
    %20 = tpu.matmul %8, %19, %cst_8 {dimension_numbers = #tpu.dot_dimension_numbers<[1], [0], [0], [1], [0, 0, 1, 1], [], []>} : vector<16x32xbf16>, vector<32x32xbf16>, vector<16x32xf32> -> vector<16x32xf32>
    %21 = arith.addf %18, %20 : vector<16x32xf32>
    %22 = vector.extract_strided_slice %13 {offsets = [96, 0], sizes = [32, 32], strides = [1, 1]} : vector<128x32xbf16> to vector<32x32xbf16>
    %cst_9 = arith.constant dense<0.000000e+00> : vector<16x32xf32>
    %23 = tpu.matmul %12, %22, %cst_9 {dimension_numbers = #tpu.dot_dimension_numbers<[1], [0], [0], [1], [0, 0, 1, 1], [], []>} : vector<16x32xbf16>, vector<32x32xbf16>, vector<16x32xf32> -> vector<16x32xf32>
    %24 = arith.addf %21, %23 : vector<16x32xf32>
    %c0_10 = arith.constant 0 : index
    %c0_11 = arith.constant 0 : index
    %25 = vector.load %arg3[%c0_10, %c0_11] : memref<16x1xf32, #tpu.memory_space<vmem>>, vector<16x1xf32>
    %c0_12 = arith.constant 0 : index
    %c0_13 = arith.constant 0 : index
    %26 = vector.load %arg5[%c0_12, %c0_13] : memref<1x32xf32, #tpu.memory_space<vmem>>, vector<1x32xf32>
    %27 = vector.broadcast %25 : vector<16x1xf32> to vector<16x32xf32>
    %28 = vector.broadcast %26 : vector<1x32xf32> to vector<16x32xf32>
    %29 = arith.mulf %27, %28 : vector<16x32xf32>
    %30 = arith.addf %24, %29 : vector<16x32xf32>
    %c0_14 = arith.constant 0 : index
    %c0_15 = arith.constant 0 : index
    %31 = vector.load %arg6[%c0_14, %c0_15] : memref<1x32xf32, #tpu.memory_space<vmem>>, vector<1x32xf32>
    %32 = vector.broadcast %31 : vector<1x32xf32> to vector<16x32xf32>
    %33 = arith.addf %30, %32 : vector<16x32xf32>
    %34 = arith.truncf %33 : vector<16x32xf32> to vector<16x32xbf16>
    %c0_16 = arith.constant 0 : index
    %c0_17 = arith.constant 0 : index
    %35 = vector.load %arg7[%c0_16, %c0_17] : memref<96x32xbf16, #tpu.memory_space<vmem>>, vector<96x32xbf16>
    %36 = vector.extract_strided_slice %35 {offsets = [0, 0], sizes = [32, 32], strides = [1, 1]} : vector<96x32xbf16> to vector<32x32xbf16>
    %cst_18 = arith.constant dense<0.000000e+00> : vector<16x32xf32>
    %37 = tpu.matmul %34, %36, %cst_18 {dimension_numbers = #tpu.dot_dimension_numbers<[1], [0], [0], [1], [0, 0, 1, 1], [], []>} : vector<16x32xbf16>, vector<32x32xbf16>, vector<16x32xf32> -> vector<16x32xf32>
    %c0_19 = arith.constant 0 : index
    %c0_20 = arith.constant 0 : index
    %38 = vector.load %arg8[%c0_19, %c0_20] : memref<1x32xf32, #tpu.memory_space<vmem>>, vector<1x32xf32>
    %39 = vector.broadcast %38 : vector<1x32xf32> to vector<16x32xf32>
    %40 = arith.addf %37, %39 : vector<16x32xf32>
    %c0_21 = arith.constant 0 : index
    %c0_22 = arith.constant 0 : index
    %41 = vector.load %arg11[%c0_21, %c0_22] : memref<16x32xf32, #tpu.memory_space<vmem>>, vector<16x32xf32>
    tpu.vector_store %arg11[%c0_21, %c0_22], %40 {strides = array<i32>} : memref<16x32xf32, #tpu.memory_space<vmem>>, vector<16x32xf32>,
    %42 = vector.extract_strided_slice %35 {offsets = [32, 0], sizes = [32, 32], strides = [1, 1]} : vector<96x32xbf16> to vector<32x32xbf16>
    %cst_23 = arith.constant dense<0.000000e+00> : vector<16x32xf32>
    %43 = tpu.matmul %34, %42, %cst_23 {dimension_numbers = #tpu.dot_dimension_numbers<[1], [0], [0], [1], [0, 0, 1, 1], [], []>} : vector<16x32xbf16>, vector<32x32xbf16>, vector<16x32xf32> -> vector<16x32xf32>
    %c0_24 = arith.constant 0 : index
    %c0_25 = arith.constant 0 : index
    %44 = vector.load %arg9[%c0_24, %c0_25] : memref<1x32xf32, #tpu.memory_space<vmem>>, vector<1x32xf32>
    %45 = vector.broadcast %44 : vector<1x32xf32> to vector<16x32xf32>
    %46 = arith.addf %43, %45 : vector<16x32xf32>
    %c0_26 = arith.constant 0 : index
    %c0_27 = arith.constant 0 : index
    %47 = vector.load %arg12[%c0_26, %c0_27] : memref<16x32xf32, #tpu.memory_space<vmem>>, vector<16x32xf32>
    tpu.vector_store %arg12[%c0_26, %c0_27], %46 {strides = array<i32>} : memref<16x32xf32, #tpu.memory_space<vmem>>, vector<16x32xf32>,
    %48 = vector.extract_strided_slice %35 {offsets = [64, 0], sizes = [32, 32], strides = [1, 1]} : vector<96x32xbf16> to vector<32x32xbf16>
    %cst_28 = arith.constant dense<0.000000e+00> : vector<16x32xf32>
    %49 = tpu.matmul %34, %48, %cst_28 {dimension_numbers = #tpu.dot_dimension_numbers<[1], [0], [0], [1], [0, 0, 1, 1], [], []>} : vector<16x32xbf16>, vector<32x32xbf16>, vector<16x32xf32> -> vector<16x32xf32>
    %c0_29 = arith.constant 0 : index
    %c0_30 = arith.constant 0 : index
    %50 = vector.load %arg10[%c0_29, %c0_30] : memref<1x32xf32, #tpu.memory_space<vmem>>, vector<1x32xf32>
    %51 = vector.broadcast %50 : vector<1x32xf32> to vector<16x32xf32>
    %52 = arith.addf %49, %51 : vector<16x32xf32>
    %c0_31 = arith.constant 0 : index
    %c0_32 = arith.constant 0 : index
    %53 = vector.load %arg13[%c0_31, %c0_32] : memref<16x32xf32, #tpu.memory_space<vmem>>, vector<16x32xf32>
    tpu.vector_store %arg13[%c0_31, %c0_32], %52 {strides = array<i32>} : memref<16x32xf32, #tpu.memory_space<vmem>>, vector<16x32xf32>,
    return
  }
  func.func @transform_0(%arg0: i32) -> (i32, i32) {
    %c0_i32 = arith.constant 0 : i32
    %c0_i32_0 = arith.constant 0 : i32
    return %arg0, %c0_i32 : i32, i32
  }
  func.func @transform_1(%arg0: i32) -> (i32, i32) {
    %c0_i32 = arith.constant 0 : i32
    %c0_i32_0 = arith.constant 0 : i32
    %c0_i32_1 = arith.constant 0 : i32
    return %c0_i32, %c0_i32_0 : i32, i32
  }
  func.func @transform_2(%arg0: i32) -> (i32, i32) {
    %c0_i32 = arith.constant 0 : i32
    %c0_i32_0 = arith.constant 0 : i32
    return %arg0, %c0_i32 : i32, i32
  }
  func.func @transform_3(%arg0: i32) -> (i32, i32) {
    %c0_i32 = arith.constant 0 : i32
    %c0_i32_0 = arith.constant 0 : i32
    %c0_i32_1 = arith.constant 0 : i32
    return %c0_i32, %c0_i32_0 : i32, i32
  }
  func.func @transform_4(%arg0: i32) -> (i32, i32) {
    %c0_i32 = arith.constant 0 : i32
    %c0_i32_0 = arith.constant 0 : i32
    %c0_i32_1 = arith.constant 0 : i32
    return %c0_i32, %c0_i32_0 : i32, i32
  }
  func.func @transform_5(%arg0: i32) -> (i32, i32) {
    %c0_i32 = arith.constant 0 : i32
    %c0_i32_0 = arith.constant 0 : i32
    %c0_i32_1 = arith.constant 0 : i32
    return %c0_i32, %c0_i32_0 : i32, i32
  }
  func.func @transform_6(%arg0: i32) -> (i32, i32) {
    %c0_i32 = arith.constant 0 : i32
    %c0_i32_0 = arith.constant 0 : i32
    %c0_i32_1 = arith.constant 0 : i32
    return %c0_i32, %c0_i32_0 : i32, i32
  }
  func.func @transform_7(%arg0: i32) -> (i32, i32) {
    %c0_i32 = arith.constant 0 : i32
    %c0_i32_0 = arith.constant 0 : i32
    %c0_i32_1 = arith.constant 0 : i32
    return %c0_i32, %c0_i32_0 : i32, i32
  }
  func.func @transform_8(%arg0: i32) -> (i32, i32) {
    %c0_i32 = arith.constant 0 : i32
    %c0_i32_0 = arith.constant 0 : i32
    %c0_i32_1 = arith.constant 0 : i32
    return %c0_i32, %c0_i32_0 : i32, i32
  }
  func.func @transform_9(%arg0: i32) -> (i32, i32) {
    %c0_i32 = arith.constant 0 : i32
    %c0_i32_0 = arith.constant 0 : i32
    %c0_i32_1 = arith.constant 0 : i32
    return %c0_i32, %c0_i32_0 : i32, i32
  }
  func.func @transform_10(%arg0: i32) -> (i32, i32) {
    %c0_i32 = arith.constant 0 : i32
    %c0_i32_0 = arith.constant 0 : i32
    return %arg0, %c0_i32 : i32, i32
  }
  func.func @transform_11(%arg0: i32) -> (i32, i32) {
    %c0_i32 = arith.constant 0 : i32
    %c0_i32_0 = arith.constant 0 : i32
    return %arg0, %c0_i32 : i32, i32
  }
  func.func @transform_12(%arg0: i32) -> (i32, i32) {
    %c0_i32 = arith.constant 0 : i32
    %c0_i32_0 = arith.constant 0 : i32
    return %arg0, %c0_i32 : i32, i32
  }
}

</mosaic_0001>

<llo_original>
// kernel: tpu_custom_call.1
$region0: #{tpu_custom_call.1}
  #allocation0 [shape = 'u32[]', space=smem, size = 0x4, offset = 0x4, fixed_abs, tag = 'smem constant byte address 0x4 - core index']
  #allocation1 [shape = 'u32[72,128]{1,0:T(1,128)}', space=vmem, size = 0x9000, scoped, tag = 'internal scratch']
  %s0 = inlined_call_operand.vmem [shape: bf16[96,32], index: 0, kind: input, shape index: {}]
  %s1 = inlined_call_operand.vmem [shape: bf16[32,32], index: 1, kind: input, shape index: {}]
  %s2 = inlined_call_operand.vmem [shape: f32[32,1], index: 2, kind: input, shape index: {}]
  %s3 = inlined_call_operand.vmem [shape: bf16[128,32], index: 3, kind: input, shape index: {}]
  %s4 = inlined_call_operand.vmem [shape: f32[1,32], index: 4, kind: input, shape index: {}]
  %s5 = inlined_call_operand.vmem [shape: f32[1,32], index: 5, kind: input, shape index: {}]
  %s6 = inlined_call_operand.vmem [shape: bf16[96,32], index: 6, kind: input, shape index: {}]
  %s7 = inlined_call_operand.vmem [shape: f32[1,32], index: 7, kind: input, shape index: {}]
  %s8 = inlined_call_operand.vmem [shape: f32[1,32], index: 8, kind: input, shape index: {}]
  %s9 = inlined_call_operand.vmem [shape: f32[1,32], index: 9, kind: input, shape index: {}]
  %s10 = inlined_call_operand.hbm [shape: f32[32,32], index: 10, kind: output, shape index: {0}]
  %s11 = inlined_call_operand.hbm [shape: f32[32,32], index: 11, kind: output, shape index: {1}]
  %s12 = inlined_call_operand.hbm [shape: f32[32,32], index: 12, kind: output, shape index: {2}]
  %13 = xla_tuple %s10, %s11, %s12
  %s14 = sld [smem:[#allocation0]]
  $region89: #{tpu_custom_call.1} parent=0
    _
  %s16 = ssub.s32 1, %s14
  %s17 = scalar_select 0, %s16, %s14
  $region1: #{tpu_custom_call.1} parent=0
    #allocation2 [shape = 'u8[16384]{0}', space=vmem, size = 0x4000, scoped, tag = 'output window, operand 0']
    #allocation3 [shape = 's32[2]{0}', space=sflag, size = 0x8, scoped, tag = 'scoped memory for tpu_custom_call.1']
    #allocation4 [shape = 'u8[16384]{0}', space=vmem, size = 0x4000, scoped, tag = 'output window, operand 1']
    #allocation5 [shape = 's32[2]{0}', space=sflag, size = 0x8, scoped, tag = 'scoped memory for tpu_custom_call.1']
    #allocation6 [shape = 'u8[16384]{0}', space=vmem, size = 0x4000, scoped, tag = 'output window, operand 2']
    %18 = vsyncpa [#allocation3], 0
    %s19 = scalar_lea.sflag [#allocation3], 1
    %20 = vsyncpa %s19, 0
    %21 = vsyncpa [#allocation5], 0
    %s22 = scalar_lea.sflag [#allocation5], 1
    %23 = vsyncpa %s22, 0
    loop: start=0, step=1, limit=4
    $region2: #{tpu_custom_call.1} parent=1 // loop_pre_header
      _
    $region3: #{tpu_custom_call.1} parent=1 // loop_header
      %s25 = sphi 0, %s29
      %p26 = scmp.ge.s32.totalorder %s25, 4
      %s35 = sphi 0, %s37
      %s38 = sphi 0, %s35
      %s39 = sphi 0, %s38
      %s55 = sphi 0, %s39
      %s59 = sphi 0, %s59
      %s61 = sphi 0, %s59
      %s62 = sphi 0, %s61
      %s76 = sphi 0, %s62
      %s82 = sphi 0, %s84
      %s85 = sphi 0, %s82
      %s86 = sphi 0, %s85
      %s102 = sphi 0, %s86
      %s106 = sphi 0, %s106
      %s108 = sphi 0, %s106
      %s109 = sphi 0, %s108
      %s123 = sphi 0, %s109
      %s127 = sphi 0, %s127
      %s129 = sphi 0, %s127
      %s130 = sphi 0, %s129
      %s144 = sphi 0, %s130
      %s148 = sphi 0, %s148
      %s150 = sphi 0, %s148
      %s151 = sphi 0, %s150
      %s165 = sphi 0, %s151
      %s169 = sphi 0, %s169
      %s171 = sphi 0, %s169
      %s172 = sphi 0, %s171
      %s186 = sphi 0, %s172
      %s190 = sphi 0, %s190
      %s192 = sphi 0, %s190
      %s193 = sphi 0, %s192
      %s207 = sphi 0, %s193
      %s211 = sphi 0, %s211
      %s213 = sphi 0, %s211
      %s214 = sphi 0, %s213
      %s228 = sphi 0, %s214
      %s232 = sphi 0, %s232
      %s234 = sphi 0, %s232
      %s235 = sphi 0, %s234
      %s249 = sphi 0, %s235
      %s255 = sphi 0, %s257
      %s258 = sphi 0, %s255
      %s259 = sphi 0, %s258
      %s275 = sphi 0, %s259
      %s281 = sphi 0, %s283
      %s284 = sphi 0, %s281
      %s285 = sphi 0, %s284
      %s301 = sphi 0, %s285
      %s307 = sphi 0, %s309
      %s310 = sphi 0, %s307
      %s311 = sphi 0, %s310
      %s327 = sphi 0, %s311
    $region4: #{tpu_custom_call.1} parent=1 // loop_header_branch
      %28 = sbr.rel (%p26) target = $region8
    $region5: #{tpu_custom_call.1} parent=1 // loop_body
      %s30 = ssub.s32 %s25, 1
      %s31 = ssub.s32 %s25, 2
      %s32 = sadd.s32 %s25, 1
      %s33 = ssub.s32 %s25, %s32
      %p34 = scmp.eq.s32.totalorder %s33, 0
      %s36 = sadd.s32 %s35, 1
      %s37 = scalar_select %p34, %s35, %s36
      %p40 = pneg %p34
      %p41 = scmp.eq.s32.totalorder %s25, 1
      %p42 = por %p40, %p41
      %p43 = scmp.ne.s32.totalorder %s35, %s38
      %p44 = scmp.eq.s32.totalorder %s25, 0
      %p45 = por %p43, %p44
      %p46 = scmp.ne.s32.totalorder %s35, %s38
      %p47 = scmp.eq.s32.totalorder %s30, 1
      %p48 = por %p46, %p47
      %p49 = scmp.ne.s32.totalorder %s38, %s39
      %p50 = scmp.eq.s32.totalorder %s30, 0
      %p51 = por %p49, %p50
      %p52 = scmp.ne.s32.totalorder %s38, %s39
      %p53 = scmp.eq.s32.totalorder %s31, 1
      %p54 = por %p52, %p53
      %p56 = scmp.ne.s32.totalorder %s39, %s55
      %p57 = scmp.eq.s32.totalorder %s31, 0
      %p58 = por %p56, %p57
      %s60 = sadd.s32 %s59, 1
      %p63 = scmp.eq.s32.totalorder %s25, 1
      %p64 = scmp.ne.s32.totalorder %s59, %s61
      %p65 = scmp.eq.s32.totalorder %s25, 0
      %p66 = por %p64, %p65
      %p67 = scmp.ne.s32.totalorder %s59, %s61
      %p68 = scmp.eq.s32.totalorder %s30, 1
      %p69 = por %p67, %p68
      %p70 = scmp.ne.s32.totalorder %s61, %s62
      %p71 = scmp.eq.s32.totalorder %s30, 0
      %p72 = por %p70, %p71
      %p73 = scmp.ne.s32.totalorder %s61, %s62
      %p74 = scmp.eq.s32.totalorder %s31, 1
      %p75 = por %p73, %p74
      %p77 = scmp.ne.s32.totalorder %s62, %s76
      %p78 = scmp.eq.s32.totalorder %s31, 0
      %p79 = por %p77, %p78
      %s80 = ssub.s32 %s25, %s32
      %p81 = scmp.eq.s32.totalorder %s80, 0
      %s83 = sadd.s32 %s82, 1
      %s84 = scalar_select %p81, %s82, %s83
      %p87 = pneg %p81
      %p88 = scmp.eq.s32.totalorder %s25, 1
      %p89 = por %p87, %p88
      %p90 = scmp.ne.s32.totalorder %s82, %s85
      %p91 = scmp.eq.s32.totalorder %s25, 0
      %p92 = por %p90, %p91
      %p93 = scmp.ne.s32.totalorder %s82, %s85
      %p94 = scmp.eq.s32.totalorder %s30, 1
      %p95 = por %p93, %p94
      %p96 = scmp.ne.s32.totalorder %s85, %s86
      %p97 = scmp.eq.s32.totalorder %s30, 0
      %p98 = por %p96, %p97
      %p99 = scmp.ne.s32.totalorder %s85, %s86
      %p100 = scmp.eq.s32.totalorder %s31, 1
      %p101 = por %p99, %p100
      %p103 = scmp.ne.s32.totalorder %s86, %s102
      %p104 = scmp.eq.s32.totalorder %s31, 0
      %p105 = por %p103, %p104
      %s107 = sadd.s32 %s106, 1
      %p110 = scmp.eq.s32.totalorder %s25, 1
      %p111 = scmp.ne.s32.totalorder %s106, %s108
      %p112 = scmp.eq.s32.totalorder %s25, 0
      %p113 = por %p111, %p112
      %p114 = scmp.ne.s32.totalorder %s106, %s108
      %p115 = scmp.eq.s32.totalorder %s30, 1
      %p116 = por %p114, %p115
      %p117 = scmp.ne.s32.totalorder %s108, %s109
      %p118 = scmp.eq.s32.totalorder %s30, 0
      %p119 = por %p117, %p118
      %p120 = scmp.ne.s32.totalorder %s108, %s109
      %p121 = scmp.eq.s32.totalorder %s31, 1
      %p122 = por %p120, %p121
      %p124 = scmp.ne.s32.totalorder %s109, %s123
      %p125 = scmp.eq.s32.totalorder %s31, 0
      %p126 = por %p124, %p125
      %s128 = sadd.s32 %s127, 1
      %p131 = scmp.eq.s32.totalorder %s25, 1
      %p132 = scmp.ne.s32.totalorder %s127, %s129
      %p133 = scmp.eq.s32.totalorder %s25, 0
      %p134 = por %p132, %p133
      %p135 = scmp.ne.s32.totalorder %s127, %s129
      %p136 = scmp.eq.s32.totalorder %s30, 1
      %p137 = por %p135, %p136
      %p138 = scmp.ne.s32.totalorder %s129, %s130
      %p139 = scmp.eq.s32.totalorder %s30, 0
      %p140 = por %p138, %p139
      %p141 = scmp.ne.s32.totalorder %s129, %s130
      %p142 = scmp.eq.s32.totalorder %s31, 1
      %p143 = por %p141, %p142
      %p145 = scmp.ne.s32.totalorder %s130, %s144
      %p146 = scmp.eq.s32.totalorder %s31, 0
      %p147 = por %p145, %p146
      %s149 = sadd.s32 %s148, 1
      %p152 = scmp.eq.s32.totalorder %s25, 1
      %p153 = scmp.ne.s32.totalorder %s148, %s150
      %p154 = scmp.eq.s32.totalorder %s25, 0
      %p155 = por %p153, %p154
      %p156 = scmp.ne.s32.totalorder %s148, %s150
      %p157 = scmp.eq.s32.totalorder %s30, 1
      %p158 = por %p156, %p157
      %p159 = scmp.ne.s32.totalorder %s150, %s151
      %p160 = scmp.eq.s32.totalorder %s30, 0
      %p161 = por %p159, %p160
      %p162 = scmp.ne.s32.totalorder %s150, %s151
      %p163 = scmp.eq.s32.totalorder %s31, 1
      %p164 = por %p162, %p163
      %p166 = scmp.ne.s32.totalorder %s151, %s165
      %p167 = scmp.eq.s32.totalorder %s31, 0
      %p168 = por %p166, %p167
      %s170 = sadd.s32 %s169, 1
      %p173 = scmp.eq.s32.totalorder %s25, 1
      %p174 = scmp.ne.s32.totalorder %s169, %s171
      %p175 = scmp.eq.s32.totalorder %s25, 0
      %p176 = por %p174, %p175
      %p177 = scmp.ne.s32.totalorder %s169, %s171
      %p178 = scmp.eq.s32.totalorder %s30, 1
      %p179 = por %p177, %p178
      %p180 = scmp.ne.s32.totalorder %s171, %s172
      %p181 = scmp.eq.s32.totalorder %s30, 0
      %p182 = por %p180, %p181
      %p183 = scmp.ne.s32.totalorder %s171, %s172
      %p184 = scmp.eq.s32.totalorder %s31, 1
      %p185 = por %p183, %p184
      %p187 = scmp.ne.s32.totalorder %s172, %s186
      %p188 = scmp.eq.s32.totalorder %s31, 0
      %p189 = por %p187, %p188
      %s191 = sadd.s32 %s190, 1
      %p194 = scmp.eq.s32.totalorder %s25, 1
      %p195 = scmp.ne.s32.totalorder %s190, %s192
      %p196 = scmp.eq.s32.totalorder %s25, 0
      %p197 = por %p195, %p196
      %p198 = scmp.ne.s32.totalorder %s190, %s192
      %p199 = scmp.eq.s32.totalorder %s30, 1
      %p200 = por %p198, %p199
      %p201 = scmp.ne.s32.totalorder %s192, %s193
      %p202 = scmp.eq.s32.totalorder %s30, 0
      %p203 = por %p201, %p202
      %p204 = scmp.ne.s32.totalorder %s192, %s193
      %p205 = scmp.eq.s32.totalorder %s31, 1
      %p206 = por %p204, %p205
      %p208 = scmp.ne.s32.totalorder %s193, %s207
      %p209 = scmp.eq.s32.totalorder %s31, 0
      %p210 = por %p208, %p209
      %s212 = sadd.s32 %s211, 1
      %p215 = scmp.eq.s32.totalorder %s25, 1
      %p216 = scmp.ne.s32.totalorder %s211, %s213
      %p217 = scmp.eq.s32.totalorder %s25, 0
      %p218 = por %p216, %p217
      %p219 = scmp.ne.s32.totalorder %s211, %s213
      %p220 = scmp.eq.s32.totalorder %s30, 1
      %p221 = por %p219, %p220
      %p222 = scmp.ne.s32.totalorder %s213, %s214
      %p223 = scmp.eq.s32.totalorder %s30, 0
      %p224 = por %p222, %p223
      %p225 = scmp.ne.s32.totalorder %s213, %s214
      %p226 = scmp.eq.s32.totalorder %s31, 1
      %p227 = por %p225, %p226
      %p229 = scmp.ne.s32.totalorder %s214, %s228
      %p230 = scmp.eq.s32.totalorder %s31, 0
      %p231 = por %p229, %p230
      %s233 = sadd.s32 %s232, 1
      %p236 = scmp.eq.s32.totalorder %s25, 1
      %p237 = scmp.ne.s32.totalorder %s232, %s234
      %p238 = scmp.eq.s32.totalorder %s25, 0
      %p239 = por %p237, %p238
      %p240 = scmp.ne.s32.totalorder %s232, %s234
      %p241 = scmp.eq.s32.totalorder %s30, 1
      %p242 = por %p240, %p241
      %p243 = scmp.ne.s32.totalorder %s234, %s235
      %p244 = scmp.eq.s32.totalorder %s30, 0
      %p245 = por %p243, %p244
      %p246 = scmp.ne.s32.totalorder %s234, %s235
      %p247 = scmp.eq.s32.totalorder %s31, 1
      %p248 = por %p246, %p247
      %p250 = scmp.ne.s32.totalorder %s235, %s249
      %p251 = scmp.eq.s32.totalorder %s31, 0
      %p252 = por %p250, %p251
      %s253 = ssub.s32 %s25, %s32
      %p254 = scmp.eq.s32.totalorder %s253, 0
      %s256 = sadd.s32 %s255, 1
      %s257 = scalar_select %p254, %s255, %s256
      %p260 = pneg %p254
      %p261 = scmp.eq.s32.totalorder %s25, 1
      %p262 = por %p260, %p261
      %p263 = scmp.ne.s32.totalorder %s255, %s258
      %p264 = scmp.eq.s32.totalorder %s25, 0
      %p265 = por %p263, %p264
      %p266 = scmp.ne.s32.totalorder %s255, %s258
      %p267 = scmp.eq.s32.totalorder %s30, 1
      %p268 = por %p266, %p267
      %p269 = scmp.ne.s32.totalorder %s258, %s259
      %p270 = scmp.eq.s32.totalorder %s30, 0
      %p271 = por %p269, %p270
      %p272 = scmp.ne.s32.totalorder %s258, %s259
      %p273 = scmp.eq.s32.totalorder %s31, 1
      %p274 = por %p272, %p273
      %p276 = scmp.ne.s32.totalorder %s259, %s275
      %p277 = scmp.eq.s32.totalorder %s31, 0
      %p278 = por %p276, %p277
      %s279 = ssub.s32 %s25, %s32
      %p280 = scmp.eq.s32.totalorder %s279, 0
      %s282 = sadd.s32 %s281, 1
      %s283 = scalar_select %p280, %s281, %s282
      %p286 = pneg %p280
      %p287 = scmp.eq.s32.totalorder %s25, 1
      %p288 = por %p286, %p287
      %p289 = scmp.ne.s32.totalorder %s281, %s284
      %p290 = scmp.eq.s32.totalorder %s25, 0
      %p291 = por %p289, %p290
      %p292 = scmp.ne.s32.totalorder %s281, %s284
      %p293 = scmp.eq.s32.totalorder %s30, 1
      %p294 = por %p292, %p293
      %p295 = scmp.ne.s32.totalorder %s284, %s285
      %p296 = scmp.eq.s32.totalorder %s30, 0
      %p297 = por %p295, %p296
      %p298 = scmp.ne.s32.totalorder %s284, %s285
      %p299 = scmp.eq.s32.totalorder %s31, 1
      %p300 = por %p298, %p299
      %p302 = scmp.ne.s32.totalorder %s285, %s301
      %p303 = scmp.eq.s32.totalorder %s31, 0
      %p304 = por %p302, %p303
      %s305 = ssub.s32 %s25, %s32
      %p306 = scmp.eq.s32.totalorder %s305, 0
      %s308 = sadd.s32 %s307, 1
      %s309 = scalar_select %p306, %s307, %s308
      %p312 = pneg %p306
      %p313 = scmp.eq.s32.totalorder %s25, 1
      %p314 = por %p312, %p313
      %p315 = scmp.ne.s32.totalorder %s307, %s310
      %p316 = scmp.eq.s32.totalorder %s25, 0
      %p317 = por %p315, %p316
      %p318 = scmp.ne.s32.totalorder %s307, %s310
      %p319 = scmp.eq.s32.totalorder %s30, 1
      %p320 = por %p318, %p319
      %p321 = scmp.ne.s32.totalorder %s310, %s311
      %p322 = scmp.eq.s32.totalorder %s30, 0
      %p323 = por %p321, %p322
      %p324 = scmp.ne.s32.totalorder %s310, %s311
      %p325 = scmp.eq.s32.totalorder %s31, 1
      %p326 = por %p324, %p325
      %p328 = scmp.ne.s32.totalorder %s311, %s327
      %p329 = scmp.eq.s32.totalorder %s31, 0
      %p330 = por %p328, %p329
      %p331 = scmp.le.s32.totalorder 1, %s25
      %p332 = scmp.lt.s32.totalorder %s25, 3
      %p333 = pnand %p331, %p332
      %p334 = pneg %p333
      // Predicated region
      $region9: #{tpu_custom_call.1} parent=5 // pred_check
        _
      $region10: #{tpu_custom_call.1} parent=5 // pred_check_branch
        %336 = sbr.rel (%p333) target = $region12
      $region11: #{tpu_custom_call.1} parent=5 // pred_region
        %s337 = ssub.s32 %s25, 1
        // Predicated region
        $region13: #{tpu_custom_call.1} parent=11 // pred_check
          %p338 = pneg %p72
        $region14: #{tpu_custom_call.1} parent=11 // pred_check_branch
          %340 = sbr.rel (%p338) target = $region16
        $region15: #{tpu_custom_call.1} parent=11 // pred_region
          _
        $region16: #{tpu_custom_call.1} parent=11 // pred_fallthru
          _
        // Predicated region
        $region17: #{tpu_custom_call.1} parent=11 // pred_check
          %p341 = pneg %p119
        $region18: #{tpu_custom_call.1} parent=11 // pred_check_branch
          %343 = sbr.rel (%p341) target = $region20
        $region19: #{tpu_custom_call.1} parent=11 // pred_region
          _
        $region20: #{tpu_custom_call.1} parent=11 // pred_fallthru
          _
        // Predicated region
        $region21: #{tpu_custom_call.1} parent=11 // pred_check
          %p344 = pneg %p140
        $region22: #{tpu_custom_call.1} parent=11 // pred_check_branch
          %346 = sbr.rel (%p344) target = $region24
        $region23: #{tpu_custom_call.1} parent=11 // pred_region
          _
        $region24: #{tpu_custom_call.1} parent=11 // pred_fallthru
          _
        // Predicated region
        $region25: #{tpu_custom_call.1} parent=11 // pred_check
          %p347 = pneg %p161
        $region26: #{tpu_custom_call.1} parent=11 // pred_check_branch
          %349 = sbr.rel (%p347) target = $region28
        $region27: #{tpu_custom_call.1} parent=11 // pred_region
          _
        $region28: #{tpu_custom_call.1} parent=11 // pred_fallthru
          _
        // Predicated region
        $region29: #{tpu_custom_call.1} parent=11 // pred_check
          %p350 = pneg %p182
        $region30: #{tpu_custom_call.1} parent=11 // pred_check_branch
          %352 = sbr.rel (%p350) target = $region32
        $region31: #{tpu_custom_call.1} parent=11 // pred_region
          _
        $region32: #{tpu_custom_call.1} parent=11 // pred_fallthru
          _
        // Predicated region
        $region33: #{tpu_custom_call.1} parent=11 // pred_check
          %p353 = pneg %p203
        $region34: #{tpu_custom_call.1} parent=11 // pred_check_branch
          %355 = sbr.rel (%p353) target = $region36
        $region35: #{tpu_custom_call.1} parent=11 // pred_region
          _
        $region36: #{tpu_custom_call.1} parent=11 // pred_fallthru
          _
        // Predicated region
        $region37: #{tpu_custom_call.1} parent=11 // pred_check
          %p356 = pneg %p224
        $region38: #{tpu_custom_call.1} parent=11 // pred_check_branch
          %358 = sbr.rel (%p356) target = $region40
        $region39: #{tpu_custom_call.1} parent=11 // pred_region
          _
        $region40: #{tpu_custom_call.1} parent=11 // pred_fallthru
          _
        // Predicated region
        $region41: #{tpu_custom_call.1} parent=11 // pred_check
          %p359 = pneg %p245
        $region42: #{tpu_custom_call.1} parent=11 // pred_check_branch
          %361 = sbr.rel (%p359) target = $region44
        $region43: #{tpu_custom_call.1} parent=11 // pred_region
          _
        $region44: #{tpu_custom_call.1} parent=11 // pred_fallthru
          _
      $region12: #{tpu_custom_call.1} parent=5 // pred_fallthru
        _
      %p362 = scmp.lt.s32.totalorder %s25, 2
      // Predicated region
      $region45: #{tpu_custom_call.1} parent=5 // pred_check
        %p363 = pneg %p362
      $region46: #{tpu_custom_call.1} parent=5 // pred_check_branch
        %365 = sbr.rel (%p363) target = $region48
      $region47: #{tpu_custom_call.1} parent=5 // pred_region
        // Predicated region
        $region49: #{tpu_custom_call.1} parent=47 // pred_check
          %p366 = pneg %p45
        $region50: #{tpu_custom_call.1} parent=47 // pred_check_branch
          %368 = sbr.rel (%p366) target = $region52
        $region51: #{tpu_custom_call.1} parent=47 // pred_region
          %s369 = smul.u32 6, %s25
          %p370 = scmp.lt.s32.totalorder %s369, 11
          %s371 = scalar_select %p370, %s369, 11
          %s372 = smul.addr %s371, 4
          %s373 = scalar_lea.vmem %s0, %s372
          %s374 = smul.u32 6, %s25
        $region52: #{tpu_custom_call.1} parent=47 // pred_fallthru
          _
        // Predicated region
        $region53: #{tpu_custom_call.1} parent=47 // pred_check
          %p375 = pneg %p92
        $region54: #{tpu_custom_call.1} parent=47 // pred_check_branch
          %377 = sbr.rel (%p375) target = $region56
        $region55: #{tpu_custom_call.1} parent=47 // pred_region
          %s378 = smul.u32 2, %s25
          %p379 = scmp.lt.s32.totalorder %s378, 3
          %s380 = scalar_select %p379, %s378, 3
          %s381 = smul.addr %s380, 8
          %s382 = scalar_lea.vmem %s2, %s381
          %s383 = smul.u32 2, %s25
        $region56: #{tpu_custom_call.1} parent=47 // pred_fallthru
          _
      $region48: #{tpu_custom_call.1} parent=5 // pred_fallthru
        _
      %p384 = scmp.le.s32.totalorder 1, %s25
      %p385 = scmp.lt.s32.totalorder %s25, 3
      %p386 = pnand %p384, %p385
      %p387 = pneg %p386
      // Predicated region
      $region57: #{tpu_custom_call.1} parent=5 // pred_check
        _
      $region58: #{tpu_custom_call.1} parent=5 // pred_check_branch
        %389 = sbr.rel (%p386) target = $region60
      $region59: #{tpu_custom_call.1} parent=5 // pred_region
        %s390 = ssub.s32 %s25, 1
        %s391 = smul.u32 6, %s30
        %p392 = scmp.lt.s32.totalorder %s391, 11
        %s393 = scalar_select %p392, %s391, 11
        %s394 = smul.addr %s393, 4
        %s395 = scalar_lea.vmem %s0, %s394
        %p396 = pneg %p51
        %p397 = pneg %p48
        %p398 = pneg %p72
        %p399 = pneg %p69
        %s400 = smul.u32 2, %s30
        %p401 = scmp.lt.s32.totalorder %s400, 3
        %s402 = scalar_select %p401, %s400, 3
        %s403 = smul.addr %s402, 8
        %s404 = scalar_lea.vmem %s2, %s403
        %p405 = pneg %p98
        %p406 = pneg %p95
        %p407 = pneg %p119
        %p408 = pneg %p116
        %p409 = pneg %p140
        %p410 = pneg %p137
        %p411 = pneg %p161
        %p412 = pneg %p158
        %p413 = pneg %p182
        %p414 = pneg %p179
        %p415 = pneg %p203
        %p416 = pneg %p200
        %p417 = pneg %p224
        %p418 = pneg %p221
        %p419 = pneg %p245
        %p420 = pneg %p242
        %p421 = pneg %p271
        %p422 = pneg %p268
        %s423 = sand.u32 %s258, 1
        %s424 = scalar_lea.sflag [#allocation3], %s423
        %s425 = sand.u32 %s258, 1
        %s426 = smul.addr %s425, 16
        %s427 = scalar_lea.vmem [#allocation2], %s426
        %p428 = pneg %p297
        %p429 = pneg %p294
        %s430 = sand.u32 %s30, 1
        %s431 = scalar_lea.sflag [#allocation5], %s430
        %s432 = sand.u32 %s284, 1
        %s433 = smul.addr %s432, 16
        %s434 = scalar_lea.vmem [#allocation4], %s433
        %p435 = pneg %p323
        %p436 = pneg %p320
        %s437 = sand.u32 %s30, 1
        %s438 = scalar_lea.sflag [#allocation5], %s437
        %s439 = sand.u32 %s310, 1
        %s440 = smul.addr %s439, 16
        %s441 = scalar_lea.vmem [#allocation6], %s440
        %s442 = smul.u32 6, %s30
        %p443 = scmp.lt.s32.totalorder %s442, 11
        %s444 = scalar_select %p443, %s442, 11
        %s445 = smul.addr %s444, 4
        %s446 = scalar_lea.vmem %s0, %s445
        %s447 = smul.u32 6, %s30
        %s448 = smul.u32 2, %s30
        %p449 = scmp.lt.s32.totalorder %s448, 3
        %s450 = scalar_select %p449, %s448, 3
        %s451 = smul.addr %s450, 8
        %s452 = scalar_lea.vmem %s2, %s451
        %s453 = smul.u32 2, %s30
        %s454 = smul.u32 2, %s30
        %s455 = smul.u32 2, %s30
        %s456 = smul.u32 2, %s30
        %v458 = vld [vmem:[%s446] sm:$0xf]
        %v459 = vld [vmem:[%s446 + $0x4] sm:$0xf]
        %v460 = vld [vmem:[%s446 + $0x8] sm:$0xf]
        %v461 = vld [vmem:[%s446 + $0xc] sm:$0xf]
        %v462 = vld [vmem:[%s446 + $0x10] sm:$0xf]
        %v463 = vld [vmem:[%s446 + $0x14] sm:$0xf]
        %v464 = vld [vmem:[%s1] sm:$0xf]
        %v465 = vld [vmem:[%s1 + $0x4] sm:$0xf]
        %v466 = vld [vmem:[%s1 + $0x8] sm:$0xf]
        %v467 = vld [vmem:[%s1 + $0xc] sm:$0xf]
        %v474 = vunpack.c.l.b16 %v458
        %v475 = vunpack.c.l.b16 %v459
        %v476 = vunpack.c.l.b16 %v460
        %v477 = vunpack.c.l.b16 %v461
        %v478 = vunpack.c.l.b16 %v462
        %v479 = vunpack.c.l.b16 %v463
        %v480 = vpack.c.b16 %v475, %v474
        %v481 = vpack.c.b16 %v477, %v476
        %v482 = vpack.c.b16 %v479, %v478
        %v487 = vunpack.c.l.b16 %v464
        %v488 = vunpack.c.l.b16 %v465
        %v489 = vunpack.c.l.b16 %v466
        %v490 = vunpack.c.l.b16 %v467
        %v491 = vpack.c.b16 %v488, %v487
        %v492 = vpack.c.b16 %v490, %v489
        %vm495 = vcmask 261120
        %v497 = vsel %vm495, %v480, 0
        %v500 = vsel %vm495, %v481, 0
        %v503 = vsel %vm495, %v482, 0
        %505 = vmatpush.bf16.msra.mxu0 0
        %506 = vmatpush.bf16.msra.mxu0 0
        %507 = vmatpush.bf16.msra.mxu0 0
        %508 = vmatpush.bf16.msra.mxu0 0
        %509 = vmatpush.bf16.msra.mxu0 0
        %510 = vmatpush.bf16.msra.mxu0 0
        %511 = vmatpush.bf16.msra.mxu0 %v492
        %512 = vmatpush.bf16.msra.mxu0 %v491
        %513 = vmatmul.bf16.gmra.mxu0 %v497
        %v514 = vpop.f32.mrf.mxu0
        %v515 = vadd.f32 0.0, %v514
        %v516 = vpop.f32.mrf.mxu0
        %v517 = vadd.f32 0.0, %v516
        %518 = vmatmul.bf16.gmra.mxu0 %v500
        %v519 = vpop.f32.mrf.mxu0
        %v520 = vadd.f32 0.0, %v519
        %v521 = vpop.f32.mrf.mxu0
        %v522 = vadd.f32 0.0, %v521
        %523 = vmatmul.bf16.gmra.mxu0 %v503
        %v524 = vpop.f32.mrf.mxu0
        %v525 = vadd.f32 0.0, %v524
        %v526 = vpop.f32.mrf.mxu0
        %v527 = vadd.f32 0.0, %v526
        %528 = vdwg.mxu0
        %v529 = vpack.c.bf16 %v517, %v515
        %v530 = vpack.c.bf16 %v522, %v520
        %v531 = vpack.c.bf16 %v527, %v525
        %s532 = smul.u32 %s30, 16
        %s533 = sshra.s32 %s532, 3
        %s534 = sand.u32 %s532, 7
        %s535 = smul.addr %s533, 4
        %s536 = scalar_lea.vmem %s1, %s535
        %v537 = vld [vmem:[%s536] sm:$0xf]
        %v538 = vld [vmem:[%s536 + $0x4] sm:$0xf]
        %v539 = vld [vmem:[%s3] sm:$0xf]
        %v540 = vld [vmem:[%s3 + $0x4] sm:$0xf]
        %v541 = vld [vmem:[%s3 + $0x8] sm:$0xf]
        %v542 = vld [vmem:[%s3 + $0xc] sm:$0xf]
        %v543 = vld [vmem:[%s3 + $0x10] sm:$0xf]
        %v544 = vld [vmem:[%s3 + $0x14] sm:$0xf]
        %v545 = vld [vmem:[%s3 + $0x18] sm:$0xf]
        %v546 = vld [vmem:[%s3 + $0x1c] sm:$0xf]
        %v547 = vld [vmem:[%s3 + $0x20] sm:$0xf]
        %v548 = vld [vmem:[%s3 + $0x24] sm:$0xf]
        %v549 = vld [vmem:[%s3 + $0x28] sm:$0xf]
        %v550 = vld [vmem:[%s3 + $0x2c] sm:$0xf]
        %v551 = vld [vmem:[%s3 + $0x30] sm:$0xf]
        %v552 = vld [vmem:[%s3 + $0x34] sm:$0xf]
        %v553 = vld [vmem:[%s3 + $0x38] sm:$0xf]
        %v554 = vld [vmem:[%s3 + $0x3c] sm:$0xf]
        %v559 = vunpack.c.l.b16 %v543
        %v560 = vunpack.c.l.b16 %v544
        %v561 = vunpack.c.l.b16 %v545
        %v562 = vunpack.c.l.b16 %v546
        %v563 = vpack.c.b16 %v560, %v559
        %v564 = vpack.c.b16 %v562, %v561
        %v568 = vsel %vm495, %v530, 0
        %570 = vmatpush.bf16.msra.mxu0 0
        %571 = vmatpush.bf16.msra.mxu0 0
        %572 = vmatpush.bf16.msra.mxu0 0
        %573 = vmatpush.bf16.msra.mxu0 0
        %574 = vmatpush.bf16.msra.mxu0 0
        %575 = vmatpush.bf16.msra.mxu0 0
        %576 = vmatpush.bf16.msra.mxu0 %v564
        %577 = vmatpush.bf16.msra.mxu0 %v563
        %578 = vmatmul.bf16.gmra.mxu0 %v568
        %v579 = vpop.f32.mrf.mxu0
        %v580 = vadd.f32 0.0, %v579
        %v581 = vpop.f32.mrf.mxu0
        %v582 = vadd.f32 0.0, %v581
        %583 = vdwg.mxu0
        %v588 = vunpack.c.l.b16 %v539
        %v589 = vunpack.c.l.b16 %v540
        %v590 = vunpack.c.l.b16 %v541
        %v591 = vunpack.c.l.b16 %v542
        %v592 = vpack.c.b16 %v589, %v588
        %v593 = vpack.c.b16 %v591, %v590
        %v597 = vsel %vm495, %v529, 0
        %599 = vmatpush.bf16.msra.mxu0 0
        %600 = vmatpush.bf16.msra.mxu0 0
        %601 = vmatpush.bf16.msra.mxu0 0
        %602 = vmatpush.bf16.msra.mxu0 0
        %603 = vmatpush.bf16.msra.mxu0 0
        %604 = vmatpush.bf16.msra.mxu0 0
        %605 = vmatpush.bf16.msra.mxu0 %v593
        %606 = vmatpush.bf16.msra.mxu0 %v592
        %607 = vmatmul.bf16.gmra.mxu0 %v597
        %v608 = vpop.f32.mrf.mxu0
        %v609 = vadd.f32 %v580, %v608
        %v610 = vpop.f32.mrf.mxu0
        %v611 = vadd.f32 %v582, %v610
        %612 = vdwg.mxu0
        %v617 = vunpack.c.l.b16 %v547
        %v618 = vunpack.c.l.b16 %v548
        %v619 = vunpack.c.l.b16 %v549
        %v620 = vunpack.c.l.b16 %v550
        %v621 = vpack.c.b16 %v618, %v617
        %v622 = vpack.c.b16 %v620, %v619
        %v626 = vsel %vm495, %v531, 0
        %628 = vmatpush.bf16.msra.mxu0 0
        %629 = vmatpush.bf16.msra.mxu0 0
        %630 = vmatpush.bf16.msra.mxu0 0
        %631 = vmatpush.bf16.msra.mxu0 0
        %632 = vmatpush.bf16.msra.mxu0 0
        %633 = vmatpush.bf16.msra.mxu0 0
        %634 = vmatpush.bf16.msra.mxu0 %v622
        %635 = vmatpush.bf16.msra.mxu0 %v621
        %636 = vmatmul.bf16.gmra.mxu0 %v626
        %v637 = vpop.f32.mrf.mxu0
        %v638 = vadd.f32 0.0, %v637
        %v639 = vpop.f32.mrf.mxu0
        %v640 = vadd.f32 0.0, %v639
        %641 = vdwg.mxu0
        %v642 = vadd.f32 %v609, %v638
        %v643 = vadd.f32 %v611, %v640
        %v646 = vunpack.c.l.b16 %v537
        %v647 = vunpack.c.l.b16 %v538
        %v648 = vpack.c.b16 %v647, %v646
        %v653 = vunpack.c.l.b16 %v551
        %v654 = vunpack.c.l.b16 %v552
        %v655 = vunpack.c.l.b16 %v553
        %v656 = vunpack.c.l.b16 %v554
        %v657 = vpack.c.b16 %v654, %v653
        %v658 = vpack.c.b16 %v656, %v655
        %v662 = vsel %vm495, %v648, 0
        %664 = vmatpush.bf16.msra.mxu0 0
        %665 = vmatpush.bf16.msra.mxu0 0
        %666 = vmatpush.bf16.msra.mxu0 0
        %667 = vmatpush.bf16.msra.mxu0 0
        %668 = vmatpush.bf16.msra.mxu0 0
        %669 = vmatpush.bf16.msra.mxu0 0
        %670 = vmatpush.bf16.msra.mxu0 %v658
        %671 = vmatpush.bf16.msra.mxu0 %v657
        %672 = vmatmul.bf16.gmra.mxu0 %v662
        %v673 = vpop.f32.mrf.mxu0
        %v674 = vadd.f32 0.0, %v673
        %v675 = vpop.f32.mrf.mxu0
        %v676 = vadd.f32 0.0, %v675
        %677 = vdwg.mxu0
        %v678 = vadd.f32 %v642, %v674
        %v679 = vadd.f32 %v643, %v676
        %v680 = vld [vmem:[%s452] sm:$0xff]
        %v681 = vld [vmem:[%s452 + $0x8] sm:$0xff]
        %v682 = vld [vmem:[%s4] sm:$0x1]
        %684 = vset.pattern.permute.xlu0 0
        %685 = vperm.xlu0 %684, %v680
        %v686 = vpop.permute.xlu0 %685
        %689 = vset.pattern.permute.xlu0 0
        %690 = vperm.xlu0 %689, %v681
        %v691 = vpop.permute.xlu0 %690
        %v694 = vperm.slane %v682, 0
        %v696 = vmul.f32 %v686, %v694
        %v697 = vmul.f32 %v691, %v694
        %v698 = vadd.f32 %v678, %v696
        %v699 = vadd.f32 %v679, %v697
        %v700 = vld [vmem:[%s5] sm:$0x1]
        %v702 = vperm.slane %v700, 0
        %v704 = vadd.f32 %v698, %v702
        %v705 = vadd.f32 %v699, %v702
        %v706 = vpack.c.bf16 %v705, %v704
        %v707 = vld [vmem:[%s6] sm:$0xf]
        %v708 = vld [vmem:[%s6 + $0x4] sm:$0xf]
        %v709 = vld [vmem:[%s6 + $0x8] sm:$0xf]
        %v710 = vld [vmem:[%s6 + $0xc] sm:$0xf]
        %v711 = vld [vmem:[%s6 + $0x10] sm:$0xf]
        %v712 = vld [vmem:[%s6 + $0x14] sm:$0xf]
        %v713 = vld [vmem:[%s6 + $0x18] sm:$0xf]
        %v714 = vld [vmem:[%s6 + $0x1c] sm:$0xf]
        %v715 = vld [vmem:[%s6 + $0x20] sm:$0xf]
        %v716 = vld [vmem:[%s6 + $0x24] sm:$0xf]
        %v717 = vld [vmem:[%s6 + $0x28] sm:$0xf]
        %v718 = vld [vmem:[%s6 + $0x2c] sm:$0xf]
        %v719 = vld [vmem:[%s7] sm:$0x1]
        %v721 = vperm.slane %v719, 0
        %v727 = vunpack.c.l.b16 %v707
        %v728 = vunpack.c.l.b16 %v708
        %v729 = vunpack.c.l.b16 %v709
        %v730 = vunpack.c.l.b16 %v710
        %v731 = vpack.c.b16 %v728, %v727
        %v732 = vpack.c.b16 %v730, %v729
        %v736 = vsel %vm495, %v706, 0
        %738 = vmatpush.bf16.msra.mxu0 0
        %739 = vmatpush.bf16.msra.mxu0 0
        %740 = vmatpush.bf16.msra.mxu0 0
        %741 = vmatpush.bf16.msra.mxu0 0
        %742 = vmatpush.bf16.msra.mxu0 0
        %743 = vmatpush.bf16.msra.mxu0 0
        %744 = vmatpush.bf16.msra.mxu0 %v732
        %745 = vmatpush.bf16.msra.mxu0 %v731
        %746 = vmatmul.bf16.gmra.mxu0 %v736
        %v747 = vpop.f32.mrf.mxu0
        %v748 = vadd.f32 %v721, %v747
        %v749 = vpop.f32.mrf.mxu0
        %v750 = vadd.f32 %v721, %v749
        %751 = vdwg.mxu0
        %752 = vst.msk [vmem:[%s427] sm:$0xff] %vm495, %v748
        %753 = vst.msk [vmem:[%s427 + $0x8] sm:$0xff] %vm495, %v750
        %v754 = vld [vmem:[%s8] sm:$0x1]
        %v756 = vperm.slane %v754, 0
        %v762 = vunpack.c.l.b16 %v711
        %v763 = vunpack.c.l.b16 %v712
        %v764 = vunpack.c.l.b16 %v713
        %v765 = vunpack.c.l.b16 %v714
        %v766 = vpack.c.b16 %v763, %v762
        %v767 = vpack.c.b16 %v765, %v764
        %770 = vmatpush.bf16.msra.mxu0 0
        %771 = vmatpush.bf16.msra.mxu0 0
        %772 = vmatpush.bf16.msra.mxu0 0
        %773 = vmatpush.bf16.msra.mxu0 0
        %774 = vmatpush.bf16.msra.mxu0 0
        %775 = vmatpush.bf16.msra.mxu0 0
        %776 = vmatpush.bf16.msra.mxu0 %v767
        %777 = vmatpush.bf16.msra.mxu0 %v766
        %778 = vmatmul.bf16.gmra.mxu0 %v736
        %v779 = vpop.f32.mrf.mxu0
        %v780 = vadd.f32 %v756, %v779
        %v781 = vpop.f32.mrf.mxu0
        %v782 = vadd.f32 %v756, %v781
        %783 = vdwg.mxu0
        %784 = vst.msk [vmem:[%s434] sm:$0xff] %vm495, %v780
        %785 = vst.msk [vmem:[%s434 + $0x8] sm:$0xff] %vm495, %v782
        %v786 = vld [vmem:[%s9] sm:$0x1]
        %v788 = vperm.slane %v786, 0
        %v794 = vunpack.c.l.b16 %v715
        %v795 = vunpack.c.l.b16 %v716
        %v796 = vunpack.c.l.b16 %v717
        %v797 = vunpack.c.l.b16 %v718
        %v798 = vpack.c.b16 %v795, %v794
        %v799 = vpack.c.b16 %v797, %v796
        %802 = vmatpush.bf16.msra.mxu0 0
        %803 = vmatpush.bf16.msra.mxu0 0
        %804 = vmatpush.bf16.msra.mxu0 0
        %805 = vmatpush.bf16.msra.mxu0 0
        %806 = vmatpush.bf16.msra.mxu0 0
        %807 = vmatpush.bf16.msra.mxu0 0
        %808 = vmatpush.bf16.msra.mxu0 %v799
        %809 = vmatpush.bf16.msra.mxu0 %v798
        %810 = vmatmul.bf16.gmra.mxu0 %v736
        %v811 = vpop.f32.mrf.mxu0
        %v812 = vadd.f32 %v788, %v811
        %v813 = vpop.f32.mrf.mxu0
        %v814 = vadd.f32 %v788, %v813
        %815 = vdwg.mxu0
        %816 = vst.msk [vmem:[%s441] sm:$0xff] %vm495, %v812
        %817 = vst.msk [vmem:[%s441 + $0x8] sm:$0xff] %vm495, %v814
        %s818 = sand.u32 %s258, 1
        %s819 = scalar_lea.sflag [#allocation3], %s818
        %s820 = sand.u32 %s258, 1
        %s821 = smul.addr %s820, 16
        %s822 = scalar_lea.vmem [#allocation2], %s821
        %s823 = sand.u32 %s30, 1
        %s824 = scalar_lea.sflag [#allocation5], %s823
        %s825 = sand.u32 %s284, 1
        %s826 = smul.addr %s825, 16
        %s827 = scalar_lea.vmem [#allocation4], %s826
        %s828 = sand.u32 %s30, 1
        %s829 = scalar_lea.sflag [#allocation5], %s828
        %s830 = sand.u32 %s310, 1
        %s831 = smul.addr %s830, 16
        %s832 = scalar_lea.vmem [#allocation6], %s831
        // Predicated region
        $region61: #{tpu_custom_call.1} parent=59 // pred_check
          %p833 = pneg %p268
        $region62: #{tpu_custom_call.1} parent=59 // pred_check_branch
          %835 = sbr.rel (%p833) target = $region64
        $region63: #{tpu_custom_call.1} parent=59 // pred_region
          %s836 = smul.u32 2, %s30
          %838 = vsyncadd %s819, 0
          %s839 = smul.addr %s836, 8
          %s840 = scalar_lea.hbm %s10, %s839
          %s841 = sshll.u32 %s822, 4
          %s842 = int_to_ptr.vmem [resolvable:$true] %s841
          %s843 = sshll.u32 %s840, 4
          %s844 = int_to_ptr.hbm [resolvable:$true] %s843
          %849 = dma.vmem_to_hbm [thread:$0]  %s842, 256, %s844, %s819, 128, 128, 8
        $region64: #{tpu_custom_call.1} parent=59 // pred_fallthru
          _
        // Predicated region
        $region65: #{tpu_custom_call.1} parent=59 // pred_check
          %p850 = pneg %p294
        $region66: #{tpu_custom_call.1} parent=59 // pred_check_branch
          %852 = sbr.rel (%p850) target = $region68
        $region67: #{tpu_custom_call.1} parent=59 // pred_region
          %s853 = smul.u32 2, %s30
          %855 = vsyncadd %s824, 0
          %s856 = smul.addr %s853, 8
          %s857 = scalar_lea.hbm %s11, %s856
          %s858 = sshll.u32 %s827, 4
          %s859 = int_to_ptr.vmem [resolvable:$true] %s858
          %s860 = sshll.u32 %s857, 4
          %s861 = int_to_ptr.hbm [resolvable:$true] %s860
          %866 = dma.vmem_to_hbm [thread:$0]  %s859, 256, %s861, %s824, 128, 128, 8
        $region68: #{tpu_custom_call.1} parent=59 // pred_fallthru
          _
        // Predicated region
        $region69: #{tpu_custom_call.1} parent=59 // pred_check
          %p867 = pneg %p320
        $region70: #{tpu_custom_call.1} parent=59 // pred_check_branch
          %869 = sbr.rel (%p867) target = $region72
        $region71: #{tpu_custom_call.1} parent=59 // pred_region
          %s870 = smul.u32 2, %s30
          %872 = vsyncadd %s829, 0
          %s873 = smul.addr %s870, 8
          %s874 = scalar_lea.hbm %s12, %s873
          %s875 = sshll.u32 %s832, 4
          %s876 = int_to_ptr.vmem [resolvable:$true] %s875
          %s877 = sshll.u32 %s874, 4
          %s878 = int_to_ptr.hbm [resolvable:$true] %s877
          %883 = dma.vmem_to_hbm [thread:$0]  %s876, 256, %s878, %s829, 128, 128, 8
        $region72: #{tpu_custom_call.1} parent=59 // pred_fallthru
          _
      $region60: #{tpu_custom_call.1} parent=5 // pred_fallthru
        _
      %p884 = scmp.le.s32.totalorder 2, %s25
      // Predicated region
      $region73: #{tpu_custom_call.1} parent=5 // pred_check
        %p885 = pneg %p884
      $region74: #{tpu_custom_call.1} parent=5 // pred_check_branch
        %887 = sbr.rel (%p885) target = $region76
      $region75: #{tpu_custom_call.1} parent=5 // pred_region
        %s888 = ssub.s32 %s25, 2
        // Predicated region
        $region77: #{tpu_custom_call.1} parent=75 // pred_check
          %p889 = pneg %p274
        $region78: #{tpu_custom_call.1} parent=75 // pred_check_branch
          %891 = sbr.rel (%p889) target = $region80
        $region79: #{tpu_custom_call.1} parent=75 // pred_region
          %s892 = sand.u32 %s259, 1
          %s893 = scalar_lea.sflag [#allocation3], %s892
          %s894 = sand.u32 %s259, 1
          %s895 = smul.addr %s894, 16
          %s896 = scalar_lea.vmem [#allocation2], %s895
          %898 = dma.done %s893, 256
        $region80: #{tpu_custom_call.1} parent=75 // pred_fallthru
          _
        // Predicated region
        $region81: #{tpu_custom_call.1} parent=75 // pred_check
          %p899 = pneg %p300
        $region82: #{tpu_custom_call.1} parent=75 // pred_check_branch
          %901 = sbr.rel (%p899) target = $region84
        $region83: #{tpu_custom_call.1} parent=75 // pred_region
          %s902 = sand.u32 %s31, 1
          %s903 = scalar_lea.sflag [#allocation5], %s902
          %s904 = sand.u32 %s285, 1
          %s905 = smul.addr %s904, 16
          %s906 = scalar_lea.vmem [#allocation4], %s905
          %908 = dma.done %s903, 256
        $region84: #{tpu_custom_call.1} parent=75 // pred_fallthru
          _
        // Predicated region
        $region85: #{tpu_custom_call.1} parent=75 // pred_check
          %p909 = pneg %p326
        $region86: #{tpu_custom_call.1} parent=75 // pred_check_branch
          %911 = sbr.rel (%p909) target = $region88
        $region87: #{tpu_custom_call.1} parent=75 // pred_region
          %s912 = sand.u32 %s31, 1
          %s913 = scalar_lea.sflag [#allocation5], %s912
          %s914 = sand.u32 %s311, 1
          %s915 = smul.addr %s914, 16
          %s916 = scalar_lea.vmem [#allocation6], %s915
          %918 = dma.done %s913, 256
        $region88: #{tpu_custom_call.1} parent=75 // pred_fallthru
          _
      $region76: #{tpu_custom_call.1} parent=5 // pred_fallthru
        _
    $region6: #{tpu_custom_call.1} parent=1 // loop_footer
      %s29 = sadd.s32 1, %s25
    $region7: #{tpu_custom_call.1} parent=1 // loop_footer_branch
      %24 = sbr.rel target = $region3
    $region8: #{tpu_custom_call.1} parent=1 // loop_exit
      _
    %919 = vsyncpa [#allocation3], 1
    %s920 = scalar_lea.sflag [#allocation3], 1
    %921 = vsyncpa %s920, 1
    %922 = vsyncpa [#allocation5], 1
    %s923 = scalar_lea.sflag [#allocation5], 1
    %924 = vsyncpa %s923, 1

</llo_original>
